<compile_context>
chip_gen: v6e
topology: v6e:2x2x1
jax: 0.10.0
libtpu: 0.0.40
codegen_flags: <defaults>
</compile_context>

<pallas_src>
import functools

import jax
import jax.numpy as jnp
from jax.experimental import pallas as pl
from jax.experimental.pallas import tpu as pltpu

LEAKY_SLOPE = 0.01  # nn.LeakyReLU default
BN_EPS = 1e-5       # nn.BatchNorm2d default


def _leaky(x):
    return jnp.where(x > 0, x, LEAKY_SLOPE * x)


# ---------------------------------------------------------------------------
# Fused kernel.
#
# Packed layout: activations are 2D slabs of shape (num_images*Hs, R*W*C), where
# Hs = H/R ("super-rows" of R image rows each).  A 3x3 / pad=1 conv becomes
#     out[s] = x[s-1] @ B[0] + x[s] @ B[1] + x[s+1] @ B[2]
# with B[k] precomputed (R*W*Cin, R*W*Cout) banded matrices that fold in the dx
# taps, the zero W-padding and the intra-super-row dy coupling.  The s-1 / s+1
# slabs come from pltpu.roll along sublanes; rows that would wrap across an
# image's top/bottom halo are masked to zero (no scratch staging buffers).
# ---------------------------------------------------------------------------
def fused_resblock_kernel(*refs, hs, has_residual_conv):
    if has_residual_conv:
        (x_ref, w1_ref, sh1_ref, w2_ref, sh2_ref,
         wres_ref, bres_ref, o_ref) = refs
    else:
        (x_ref, w1_ref, sh1_ref, w2_ref, sh2_ref, o_ref) = refs

    x = x_ref[...]                                  # (M, R*W*Cin) float32
    m = x.shape[0]

    # Hoisted halo masks: super-row index within each image.
    row = jax.lax.broadcasted_iota(jnp.int32, (m, 1), 0) % hs
    not_top = row != 0                              # previous super-row is in-image
    not_bot = row != (hs - 1)                       # next super-row is in-image

    def conv3(xf, w_ref):
        # dy = -1 / +1 super-row slabs via XLU roll + halo masking.
        xprev = jnp.where(not_top, pltpu.roll(xf, 1, axis=0), 0.0)
        xnext = jnp.where(not_bot, pltpu.roll(xf, m - 1, axis=0), 0.0)
        # bf16 MXU path, f32 accumulation.
        acc = jnp.dot(xprev.astype(jnp.bfloat16), w_ref[0],
                      preferred_element_type=jnp.float32)
        acc = acc + jnp.dot(xf.astype(jnp.bfloat16), w_ref[1],
                            preferred_element_type=jnp.float32)
        acc = acc + jnp.dot(xnext.astype(jnp.bfloat16), w_ref[2],
                            preferred_element_type=jnp.float32)
        return acc

    # conv1 (+ folded BN1: scale in weight columns, shift here) + LeakyReLU.
    h = _leaky(conv3(x, w1_ref) + sh1_ref[...])
    # Dropout(0.3) is identity in eval mode.

    # conv2 (+ folded BN2).
    y = conv3(h, w2_ref) + sh2_ref[...]

    # Residual branch (fused block-diagonal 1x1 conv, or identity kept in f32).
    if has_residual_conv:
        res = jnp.dot(x.astype(jnp.bfloat16), wres_ref[...],
                      preferred_element_type=jnp.float32) + bres_ref[...]
    else:
        res = x

    o_ref[...] = _leaky(y + res).astype(o_ref.dtype)


# ---------------------------------------------------------------------------
# Wrapper-side (pure JAX, tiny) weight reshuffling
# ---------------------------------------------------------------------------
def _banded_conv_weights(w_hwio, W, R):
    """(3,3,Cin,Cout) HWIO -> (3, R*W*Cin, R*W*Cout) banded super-row matrices."""
    kh, kw, cin, cout = w_hwio.shape
    ky = jnp.arange(kh)                  # dy = ky - 1
    kx = jnp.arange(kw)                  # dx = kx - 1
    r_in = jnp.arange(R)
    r_out = jnp.arange(R)
    w_in = jnp.arange(W)
    w_out = jnp.arange(W)
    shift = jnp.arange(3)                # 0: prev super-row, 1: same, 2: next
    # mask_r[shift, ky, r_in, r_out] = [r_in == r_out + (ky-1) - (shift-1)*R]
    mask_r = (r_in[None, None, :, None] ==
              (r_out[None, None, None, :] + (ky[None, :, None, None] - 1)
               - (shift[:, None, None, None] - 1) * R)).astype(w_hwio.dtype)
    # mask_w[kx, w_in, w_out] = [w_in == w_out + kx - 1]  (zero W-padding folded in)
    mask_w = (w_in[None, :, None] ==
              (w_out[None, None, :] + kx[:, None, None] - 1)).astype(w_hwio.dtype)
    b = jnp.einsum("syab,xcd,yxio->sacibdo", mask_r, mask_w, w_hwio)
    return b.reshape(3, R * W * cin, R * W * cout)


def _blockdiag_1x1(wres, W, R):
    """(Cin, Cout) 1x1-conv weight -> (R*W*Cin, R*W*Cout) block-diagonal matrix."""
    cin, cout = wres.shape
    eye = jnp.eye(R * W, dtype=wres.dtype)
    return jnp.einsum("ab,io->aibo", eye, wres).reshape(R * W * cin, R * W * cout)


def _fold_bn_into_conv(w_hwio, bias, bn):
    """Fold BN (running stats): scale the Cout weight columns, return the shift."""
    gamma, beta, mean, var = bn
    scale = gamma * jax.lax.rsqrt(var + BN_EPS)      # (Cout,)
    return w_hwio * scale, beta + (bias - mean) * scale


def _pick_rows_per_superrow(H, W, cin, cout):
    """Smallest power-of-2 row-packing R (dividing H) making the output lane width
    R*W*cout a multiple of 128 while keeping K = R*W*cin within one MXU pass (<=256)."""
    # TODO(synk): beyond one MXU pass, drop the banded trick (see header TODO).
    best, r = 1, 1
    while r <= H and H % r == 0:
        if r * W * max(cin, cout) <= 256:
            best = r
            if (r * W * cout) % 128 == 0:
                return r
        r *= 2
    return best


def _pick_images_per_step(n_img, rows_per_img):
    """Images per grid step: raise matmul M toward >=128 sublanes, but keep >=2
    parallel grid steps when possible (v7x has 2 TensorCores per chip)."""
    target = max(1, 128 // rows_per_img)
    best = 1
    for cand in range(1, n_img + 1):
        if n_img % cand == 0 and cand <= target and n_img // cand >= min(2, n_img):
            best = cand
    return best


# ---------------------------------------------------------------------------
# Parameters & forward
# ---------------------------------------------------------------------------
def init_params(key, channel_dim, reduce_channels=False):
    dim = channel_dim
    in_dim = dim * 2 if reduce_channels else dim
    ks = jax.random.split(key, 12)

    def bn_params(k):
        k1, k2, k3, k4 = jax.random.split(k, 4)
        gamma = 1.0 + 0.1 * jax.random.normal(k1, (dim,), jnp.float32)
        beta = 0.1 * jax.random.normal(k2, (dim,), jnp.float32)
        mean = 0.1 * jax.random.normal(k3, (dim,), jnp.float32)
        var = 0.5 + jnp.abs(jax.random.normal(k4, (dim,), jnp.float32))
        return gamma, beta, mean, var

    p = {
        "w1": 0.1 * jax.random.normal(ks[0], (3, 3, in_dim, dim), jnp.float32),
        "b1": 0.1 * jax.random.normal(ks[1], (dim,), jnp.float32),
        "bn1": bn_params(ks[2]),
        "w2": 0.1 * jax.random.normal(ks[3], (3, 3, dim, dim), jnp.float32),
        "b2": 0.1 * jax.random.normal(ks[4], (dim,), jnp.float32),
        "bn2": bn_params(ks[5]),
    }
    if reduce_channels:
        p["wres"] = 0.1 * jax.random.normal(ks[6], (in_dim, dim), jnp.float32)
        p["bres"] = 0.1 * jax.random.normal(ks[7], (dim,), jnp.float32)
    return p


@functools.partial(jax.jit, static_argnames=("reduce_channels",))
def resnet_block_forward(x_nchw, params, reduce_channels=False):
    """Forward pass. x_nchw: (N, Cin, H, W) float32 -> (N, dim, H, W) float32."""
    N, Cin, H, W = x_nchw.shape
    dim = params["w1"].shape[-1]
    assert params["w1"].shape[:2] == (3, 3)  # kernel_size=3, stride=1, padding=1

    R = _pick_rows_per_superrow(H, W, Cin, dim)
    Hs = H // R                          # super-rows per image
    Lin, Lout = R * W * Cin, R * W * dim

    img_block = _pick_images_per_step(N, Hs)
    M = img_block * Hs                   # matmul M (sublanes) per grid step
    if M % 8 != 0 and (N // img_block) != 1:
        img_block, M = N, N * Hs         # fall back to a full-extent block

    # NCHW -> packed super-row slab (N*Hs, R*W*Cin). Lane order is (r, w, c).
    # TODO(synk): when chaining ResnetBlocks, keep activations in this packed layout
    # between blocks and hoist the NCHW<->packed transposes to the model boundary.
    x = jnp.transpose(x_nchw, (0, 2, 3, 1)).reshape(N * Hs, Lin)

    # Fold BN into conv weights, build banded bf16 matrices, keep shifts in f32.
    w1f, shift1 = _fold_bn_into_conv(params["w1"], params["b1"], params["bn1"])
    w2f, shift2 = _fold_bn_into_conv(params["w2"], params["b2"], params["bn2"])
    w1b = _banded_conv_weights(w1f, W, R).astype(jnp.bfloat16)   # (3, Lin,  Lout)
    w2b = _banded_conv_weights(w2f, W, R).astype(jnp.bfloat16)   # (3, Lout, Lout)
    sh1 = jnp.tile(shift1, R * W).reshape(1, Lout)
    sh2 = jnp.tile(shift2, R * W).reshape(1, Lout)

    args = [x, w1b, sh1, w2b, sh2]
    in_specs = [
        pl.BlockSpec((M, Lin), lambda n: (n, 0)),
        pl.BlockSpec((3, Lin, Lout), lambda n: (0, 0, 0)),
        pl.BlockSpec((1, Lout), lambda n: (0, 0)),
        pl.BlockSpec((3, Lout, Lout), lambda n: (0, 0, 0)),
        pl.BlockSpec((1, Lout), lambda n: (0, 0)),
    ]
    if reduce_channels:
        wresb = _blockdiag_1x1(params["wres"], W, R).astype(jnp.bfloat16)
        bres = jnp.tile(params["bres"], R * W).reshape(1, Lout)
        args += [wresb, bres]
        in_specs += [
            pl.BlockSpec((Lin, Lout), lambda n: (0, 0)),
            pl.BlockSpec((1, Lout), lambda n: (0, 0)),
        ]
    # NOTE: the constant-index weight blocks are only DMA'd once (block index never
    # changes). On v7x's 64 MiB VMEM they could additionally be single-buffered via
    # pipeline_mode=pl.Buffered(1) at production sizes.

    out = pl.pallas_call(
        functools.partial(fused_resblock_kernel, hs=Hs,
                          has_residual_conv=reduce_channels),
        out_shape=jax.ShapeDtypeStruct((N * Hs, Lout), jnp.float32),
        grid_spec=pltpu.PrefetchScalarGridSpec(
            num_scalar_prefetch=0,
            grid=(N // img_block,),
            in_specs=in_specs,
            out_specs=pl.BlockSpec((M, Lout), lambda n: (n, 0)),
        ),
        compiler_params=pltpu.CompilerParams(
            dimension_semantics=("parallel",)),
    )(*args)

    # (N*Hs, R*W*dim) -> (N, dim, H, W)
    return jnp.transpose(out.reshape(N, H, W, dim), (0, 3, 1, 2))


# ---------------------------------------------------------------------------
# Pure-JAX reference (for validation)
# ---------------------------------------------------------------------------
def ref_forward(x_nchw, params, reduce_channels=False):
    x = jnp.transpose(x_nchw, (0, 2, 3, 1))

    def conv(inp, w, b):
        y = jax.lax.conv_general_dilated(
            inp, w, window_strides=(1, 1), padding="SAME",
            dimension_numbers=("NHWC", "HWIO", "NHWC"))
        return y + b

    def bn(inp, bnp):
        g, be, m, v = bnp
        return (inp - m) / jnp.sqrt(v + BN_EPS) * g + be

    h = _leaky(bn(conv(x, params["w1"], params["b1"]), params["bn1"]))
    h = bn(conv(h, params["w2"], params["b2"]), params["bn2"])
    if reduce_channels:
        res = jnp.einsum("nhwc,cd->nhwd", x, params["wres"]) + params["bres"]
    else:
        res = x
    out = _leaky(res + h)
    return jnp.transpose(out, (0, 3, 1, 2))


if __name__ == "__main__":
    key = jax.random.PRNGKey(0)
    k_x1, k_p1, k_x2, k_p2 = jax.random.split(key, 4)

    # bf16 matmul inputs with f32 accumulation -> ~1e-2-level drift vs. the f32 reference.
    TOL = 5e-2

    # Case 1: default (reduce_channels=False), x: (2, 4, 16, 16) NCHW
    C, H, W, N = 4, 16, 16, 2
    x1 = jax.random.normal(k_x1, (N, C, H, W), jnp.float32)
    p1 = init_params(k_p1, C, reduce_channels=False)
    out1 = jax.block_until_ready(resnet_block_forward(x1, p1, reduce_channels=False))
    ref1 = ref_forward(x1, p1, reduce_channels=False)
    assert out1.shape == (N, C, H, W)
    assert jnp.allclose(out1, ref1, atol=TOL, rtol=TOL)

    # Case 2: reduce_channels=True, input has 2*C channels, output has C channels
    x2 = jax.random.normal(k_x2, (N, 2 * C, H, W), jnp.float32)
    p2 = init_params(k_p2, C, reduce_channels=True)
    out2 = jax.block_until_ready(resnet_block_forward(x2, p2, reduce_channels=True))
    ref2 = ref_forward(x2, p2, reduce_channels=True)
    assert out2.shape == (N, C, H, W)
    assert jnp.allclose(out2, ref2, atol=TOL, rtol=TOL)

    print("KERNEL_OK")
</pallas_src>

<mosaic_0001>
module attributes {stable_mosaic.version = 11 : i64} {
  func.func @fused_resblock_kernel(%arg0: i32, %arg1: memref<8x128xf32, #tpu.memory_space<vmem>>, %arg2: memref<3x128x128xbf16, #tpu.memory_space<vmem>>, %arg3: memref<1x128xf32, #tpu.memory_space<vmem>>, %arg4: memref<3x128x128xbf16, #tpu.memory_space<vmem>>, %arg5: memref<1x128xf32, #tpu.memory_space<vmem>>, %arg6: memref<8x128xf32, #tpu.memory_space<vmem>>) attributes {dimension_semantics = [#tpu.dimension_semantics<parallel>], iteration_bounds = array<i64: 2>, scalar_prefetch = 0 : i64, scratch_operands = 0 : i64, tpu.core_type = #tpu.core_type<tc>, window_params = [{transform_indices = @transform_0, window_bounds = array<i64: 8, 128>}, {pipeline_mode = #tpu.pipeline_mode<synchronous>, transform_indices = @transform_1, window_bounds = array<i64: 3, 128, 128>}, {pipeline_mode = #tpu.pipeline_mode<synchronous>, transform_indices = @transform_2, window_bounds = array<i64: 1, 128>}, {pipeline_mode = #tpu.pipeline_mode<synchronous>, transform_indices = @transform_3, window_bounds = array<i64: 3, 128, 128>}, {pipeline_mode = #tpu.pipeline_mode<synchronous>, transform_indices = @transform_4, window_bounds = array<i64: 1, 128>}, {transform_indices = @transform_5, window_bounds = array<i64: 8, 128>}]} {
    %c0 = arith.constant 0 : index
    %c0_0 = arith.constant 0 : index
    %0 = vector.load %arg1[%c0, %c0_0] : memref<8x128xf32, #tpu.memory_space<vmem>>, vector<8x128xf32>
    %1 = tpu.iota {dimensions = array<i32: 0>} : vector<8x1xi32>
    %c8_i32 = arith.constant 8 : i32
    %c0_i32 = arith.constant 0 : i32
    %2 = arith.cmpi eq, %c8_i32, %c0_i32 : i32
    %c1_i32 = arith.constant 1 : i32
    %3 = arith.select %2, %c1_i32, %c8_i32 : i32
    %4 = vector.broadcast %3 : i32 to vector<8x1xi32>
    %5 = arith.remsi %1, %4 : vector<8x1xi32>
    %c0_i32_1 = arith.constant 0 : i32
    %6 = vector.broadcast %c0_i32_1 : i32 to vector<8x1xi32>
    %7 = arith.cmpi ne, %5, %6 : vector<8x1xi32>
    %c0_i32_2 = arith.constant 0 : i32
    %8 = vector.broadcast %c0_i32_2 : i32 to vector<8x1xi32>
    %9 = arith.cmpi slt, %5, %8 : vector<8x1xi32>
    %c0_i32_3 = arith.constant 0 : i32
    %10 = arith.cmpi slt, %3, %c0_i32_3 : i32
    %11 = vector.broadcast %10 : i1 to vector<8x1xi1>
    %12 = vector.broadcast %11 : vector<8x1xi1> to vector<8x1xi1>
    %13 = arith.xori %9, %12 : vector<8x1xi1>
    %14 = arith.andi %13, %7 : vector<8x1xi1>
    %15 = vector.broadcast %3 : i32 to vector<8x1xi32>
    %16 = arith.addi %5, %15 : vector<8x1xi32>
    %17 = arith.select %14, %16, %5 : vector<8x1xi1>, vector<8x1xi32>
    %c0_i32_4 = arith.constant 0 : i32
    %18 = vector.broadcast %c0_i32_4 : i32 to vector<8x1xi32>
    %19 = arith.cmpi ne, %17, %18 : vector<8x1xi32>
    %c7_i32 = arith.constant 7 : i32
    %20 = vector.broadcast %c7_i32 : i32 to vector<8x1xi32>
    %21 = arith.cmpi ne, %17, %20 : vector<8x1xi32>
    %c1_i32_5 = arith.constant 1 : i32
    %22 = tpu.dynamic_rotate %0 by %c1_i32_5 dim 0 : vector<8x128xf32>, i32 -> vector<8x128xf32>
    %cst = arith.constant 0.000000e+00 : f32
    %23 = vector.shape_cast %19 : vector<8x1xi1> to vector<8x1xi1>
    %24 = vector.broadcast %23 : vector<8x1xi1> to vector<8x128xi1>
    %25 = vector.broadcast %cst : f32 to vector<8x128xf32>
    %26 = arith.select %24, %22, %25 : vector<8x128xi1>, vector<8x128xf32>
    %c7_i32_6 = arith.constant 7 : i32
    %27 = tpu.dynamic_rotate %0 by %c7_i32_6 dim 0 : vector<8x128xf32>, i32 -> vector<8x128xf32>
    %cst_7 = arith.constant 0.000000e+00 : f32
    %28 = vector.shape_cast %21 : vector<8x1xi1> to vector<8x1xi1>
    %29 = vector.broadcast %28 : vector<8x1xi1> to vector<8x128xi1>
    %30 = vector.broadcast %cst_7 : f32 to vector<8x128xf32>
    %31 = arith.select %29, %27, %30 : vector<8x128xi1>, vector<8x128xf32>
    %32 = arith.truncf %26 : vector<8x128xf32> to vector<8x128xbf16>
    %c0_8 = arith.constant 0 : index
    %c0_9 = arith.constant 0 : index
    %c0_10 = arith.constant 0 : index
    %33 = vector.load %arg2[%c0_8, %c0_9, %c0_10] : memref<3x128x128xbf16, #tpu.memory_space<vmem>>, vector<1x128x128xbf16>
    %34 = vector.shape_cast %33 : vector<1x128x128xbf16> to vector<128x128xbf16>
    %cst_11 = arith.constant dense<0.000000e+00> : vector<8x128xf32>
    %35 = tpu.matmul %32, %34, %cst_11 {dimension_numbers = #tpu.dot_dimension_numbers<[1], [0], [0], [1], [0, 0, 1, 1], [], []>} : vector<8x128xbf16>, vector<128x128xbf16>, vector<8x128xf32> -> vector<8x128xf32>
    %36 = arith.truncf %0 : vector<8x128xf32> to vector<8x128xbf16>
    %c1 = arith.constant 1 : index
    %c0_12 = arith.constant 0 : index
    %c0_13 = arith.constant 0 : index
    %37 = vector.load %arg2[%c1, %c0_12, %c0_13] : memref<3x128x128xbf16, #tpu.memory_space<vmem>>, vector<1x128x128xbf16>
    %38 = vector.shape_cast %37 : vector<1x128x128xbf16> to vector<128x128xbf16>
    %cst_14 = arith.constant dense<0.000000e+00> : vector<8x128xf32>
    %39 = tpu.matmul %36, %38, %cst_14 {dimension_numbers = #tpu.dot_dimension_numbers<[1], [0], [0], [1], [0, 0, 1, 1], [], []>} : vector<8x128xbf16>, vector<128x128xbf16>, vector<8x128xf32> -> vector<8x128xf32>
    %40 = arith.addf %35, %39 : vector<8x128xf32>
    %41 = arith.truncf %31 : vector<8x128xf32> to vector<8x128xbf16>
    %c2 = arith.constant 2 : index
    %c0_15 = arith.constant 0 : index
    %c0_16 = arith.constant 0 : index
    %42 = vector.load %arg2[%c2, %c0_15, %c0_16] : memref<3x128x128xbf16, #tpu.memory_space<vmem>>, vector<1x128x128xbf16>
    %43 = vector.shape_cast %42 : vector<1x128x128xbf16> to vector<128x128xbf16>
    %cst_17 = arith.constant dense<0.000000e+00> : vector<8x128xf32>
    %44 = tpu.matmul %41, %43, %cst_17 {dimension_numbers = #tpu.dot_dimension_numbers<[1], [0], [0], [1], [0, 0, 1, 1], [], []>} : vector<8x128xbf16>, vector<128x128xbf16>, vector<8x128xf32> -> vector<8x128xf32>
    %45 = arith.addf %40, %44 : vector<8x128xf32>
    %c0_18 = arith.constant 0 : index
    %c0_19 = arith.constant 0 : index
    %46 = vector.load %arg3[%c0_18, %c0_19] : memref<1x128xf32, #tpu.memory_space<vmem>>, vector<1x128xf32>
    %47 = vector.broadcast %46 : vector<1x128xf32> to vector<8x128xf32>
    %48 = arith.addf %45, %47 : vector<8x128xf32>
    %cst_20 = arith.constant 0.000000e+00 : f32
    %49 = vector.broadcast %cst_20 : f32 to vector<8x128xf32>
    %50 = arith.cmpf ogt, %48, %49 : vector<8x128xf32>
    %cst_21 = arith.constant 0.00999999977 : f32
    %51 = vector.broadcast %cst_21 : f32 to vector<8x128xf32>
    %52 = arith.mulf %51, %48 : vector<8x128xf32>
    %53 = arith.select %50, %48, %52 : vector<8x128xi1>, vector<8x128xf32>
    %c1_i32_22 = arith.constant 1 : i32
    %54 = tpu.dynamic_rotate %53 by %c1_i32_22 dim 0 : vector<8x128xf32>, i32 -> vector<8x128xf32>
    %cst_23 = arith.constant 0.000000e+00 : f32
    %55 = vector.shape_cast %19 : vector<8x1xi1> to vector<8x1xi1>
    %56 = vector.broadcast %55 : vector<8x1xi1> to vector<8x128xi1>
    %57 = vector.broadcast %cst_23 : f32 to vector<8x128xf32>
    %58 = arith.select %56, %54, %57 : vector<8x128xi1>, vector<8x128xf32>
    %c7_i32_24 = arith.constant 7 : i32
    %59 = tpu.dynamic_rotate %53 by %c7_i32_24 dim 0 : vector<8x128xf32>, i32 -> vector<8x128xf32>
    %cst_25 = arith.constant 0.000000e+00 : f32
    %60 = vector.shape_cast %21 : vector<8x1xi1> to vector<8x1xi1>
    %61 = vector.broadcast %60 : vector<8x1xi1> to vector<8x128xi1>
    %62 = vector.broadcast %cst_25 : f32 to vector<8x128xf32>
    %63 = arith.select %61, %59, %62 : vector<8x128xi1>, vector<8x128xf32>
    %64 = arith.truncf %58 : vector<8x128xf32> to vector<8x128xbf16>
    %c0_26 = arith.constant 0 : index
    %c0_27 = arith.constant 0 : index
    %c0_28 = arith.constant 0 : index
    %65 = vector.load %arg4[%c0_26, %c0_27, %c0_28] : memref<3x128x128xbf16, #tpu.memory_space<vmem>>, vector<1x128x128xbf16>
    %66 = vector.shape_cast %65 : vector<1x128x128xbf16> to vector<128x128xbf16>
    %cst_29 = arith.constant dense<0.000000e+00> : vector<8x128xf32>
    %67 = tpu.matmul %64, %66, %cst_29 {dimension_numbers = #tpu.dot_dimension_numbers<[1], [0], [0], [1], [0, 0, 1, 1], [], []>} : vector<8x128xbf16>, vector<128x128xbf16>, vector<8x128xf32> -> vector<8x128xf32>
    %68 = arith.truncf %53 : vector<8x128xf32> to vector<8x128xbf16>
    %c1_30 = arith.constant 1 : index
    %c0_31 = arith.constant 0 : index
    %c0_32 = arith.constant 0 : index
    %69 = vector.load %arg4[%c1_30, %c0_31, %c0_32] : memref<3x128x128xbf16, #tpu.memory_space<vmem>>, vector<1x128x128xbf16>
    %70 = vector.shape_cast %69 : vector<1x128x128xbf16> to vector<128x128xbf16>
    %cst_33 = arith.constant dense<0.000000e+00> : vector<8x128xf32>
    %71 = tpu.matmul %68, %70, %cst_33 {dimension_numbers = #tpu.dot_dimension_numbers<[1], [0], [0], [1], [0, 0, 1, 1], [], []>} : vector<8x128xbf16>, vector<128x128xbf16>, vector<8x128xf32> -> vector<8x128xf32>
    %72 = arith.addf %67, %71 : vector<8x128xf32>
    %73 = arith.truncf %63 : vector<8x128xf32> to vector<8x128xbf16>
    %c2_34 = arith.constant 2 : index
    %c0_35 = arith.constant 0 : index
    %c0_36 = arith.constant 0 : index
    %74 = vector.load %arg4[%c2_34, %c0_35, %c0_36] : memref<3x128x128xbf16, #tpu.memory_space<vmem>>, vector<1x128x128xbf16>
    %75 = vector.shape_cast %74 : vector<1x128x128xbf16> to vector<128x128xbf16>
    %cst_37 = arith.constant dense<0.000000e+00> : vector<8x128xf32>
    %76 = tpu.matmul %73, %75, %cst_37 {dimension_numbers = #tpu.dot_dimension_numbers<[1], [0], [0], [1], [0, 0, 1, 1], [], []>} : vector<8x128xbf16>, vector<128x128xbf16>, vector<8x128xf32> -> vector<8x128xf32>
    %77 = arith.addf %72, %76 : vector<8x128xf32>
    %c0_38 = arith.constant 0 : index
    %c0_39 = arith.constant 0 : index
    %78 = vector.load %arg5[%c0_38, %c0_39] : memref<1x128xf32, #tpu.memory_space<vmem>>, vector<1x128xf32>
    %79 = vector.broadcast %78 : vector<1x128xf32> to vector<8x128xf32>
    %80 = arith.addf %77, %79 : vector<8x128xf32>
    %81 = arith.addf %80, %0 : vector<8x128xf32>
    %cst_40 = arith.constant 0.000000e+00 : f32
    %82 = vector.broadcast %cst_40 : f32 to vector<8x128xf32>
    %83 = arith.cmpf ogt, %81, %82 : vector<8x128xf32>
    %cst_41 = arith.constant 0.00999999977 : f32
    %84 = vector.broadcast %cst_41 : f32 to vector<8x128xf32>
    %85 = arith.mulf %84, %81 : vector<8x128xf32>
    %86 = arith.select %83, %81, %85 : vector<8x128xi1>, vector<8x128xf32>
    %c0_42 = arith.constant 0 : index
    %c0_43 = arith.constant 0 : index
    %87 = vector.load %arg6[%c0_42, %c0_43] : memref<8x128xf32, #tpu.memory_space<vmem>>, vector<8x128xf32>
    tpu.vector_store %arg6[%c0_42, %c0_43], %86 {strides = array<i32>} : memref<8x128xf32, #tpu.memory_space<vmem>>, vector<8x128xf32>,
    return
  }
  func.func @transform_0(%arg0: i32) -> (i32, i32) {
    %c0_i32 = arith.constant 0 : i32
    %c0_i32_0 = arith.constant 0 : i32
    return %arg0, %c0_i32 : i32, i32
  }
  func.func @transform_1(%arg0: i32) -> (i32, i32, i32) {
    %c0_i32 = arith.constant 0 : i32
    %c0_i32_0 = arith.constant 0 : i32
    %c0_i32_1 = arith.constant 0 : i32
    %c0_i32_2 = arith.constant 0 : i32
    return %c0_i32, %c0_i32_0, %c0_i32_1 : i32, i32, i32
  }
  func.func @transform_2(%arg0: i32) -> (i32, i32) {
    %c0_i32 = arith.constant 0 : i32
    %c0_i32_0 = arith.constant 0 : i32
    %c0_i32_1 = arith.constant 0 : i32
    return %c0_i32, %c0_i32_0 : i32, i32
  }
  func.func @transform_3(%arg0: i32) -> (i32, i32, i32) {
    %c0_i32 = arith.constant 0 : i32
    %c0_i32_0 = arith.constant 0 : i32
    %c0_i32_1 = arith.constant 0 : i32
    %c0_i32_2 = arith.constant 0 : i32
    return %c0_i32, %c0_i32_0, %c0_i32_1 : i32, i32, i32
  }
  func.func @transform_4(%arg0: i32) -> (i32, i32) {
    %c0_i32 = arith.constant 0 : i32
    %c0_i32_0 = arith.constant 0 : i32
    %c0_i32_1 = arith.constant 0 : i32
    return %c0_i32, %c0_i32_0 : i32, i32
  }
  func.func @transform_5(%arg0: i32) -> (i32, i32) {
    %c0_i32 = arith.constant 0 : i32
    %c0_i32_0 = arith.constant 0 : i32
    return %arg0, %c0_i32 : i32, i32
  }
}

</mosaic_0001>

<llo_original>
// kernel: tile.13
$region0: #{tile.13}
  #allocation0 [shape = 's32[1]{0}', space=sflag, size = 0x4, scoped, tag = 'scoped memory for tile.13']
  %s0 = inlined_call_operand.vmem [shape: f32[4], index: 0, kind: input, shape index: {}]
  %s1 = inlined_call_operand.vmem [shape: f32[32,4], index: 1, kind: output, shape index: {}]
  // Predicated region
  $region2: #{tile.13} parent=0 // pred_check
    _
  $region3: #{tile.13} parent=0 // pred_check_branch
    %3 = sbr.rel (0) target = $region5
  $region4: #{tile.13} parent=0 // pred_region
    _
  $region5: #{tile.13} parent=0 // pred_fallthru
    _
  %v4 = vld [vmem:[%s0] ss:$0 sm:$0xff]
  %5 = vst [vmem:[%s1] sm:$0xff] %v4
  %s6 = scalar_lea.vmem %s1, 8
  %7 = vst [vmem:[%s6] sm:$0xff] %v4
  %s8 = scalar_lea.vmem %s1, 16
  %9 = vst [vmem:[%s8] sm:$0xff] %v4
  %s10 = scalar_lea.vmem %s1, 24
  %11 = vst [vmem:[%s10] sm:$0xff] %v4

// kernel: tile.14
$region0: #{tile.14}
  %s0 = inlined_call_operand.vmem [shape: f32[32,4], index: 0, kind: input, shape index: {}]
  %s1 = inlined_call_operand.vmem [shape: f32[1,128], index: 1, kind: output, shape index: {}]
  $region1: #{tile.14} parent=0
    #allocation0 [shape = 'u8[4096]{0}', space=vmem, size = 0x1000, scoped, tag = 'scoped mem for output reshape']
    %v2 = vld [vmem:[%s0] sm:$0x1]
    %vm3 = vcmask 31744
    %4 = vst.msk [vmem:[#allocation0] sm:$0x1] %vm3, %v2
    %s5 = scalar_lea.vmem %s0, 31
    %v6 = vld [vmem:[%s5] sm:$0x1]
    %7 = vrot.lane.b32.xlu0 %v6, 124
    %v8 = vpop.permute.xlu0 %7
    %vm9 = vcmask 1048544
    %10 = vst.msk [vmem:[#allocation0] sm:$0x1] %vm9, %v8
    %s11 = scalar_lea.vmem %s0, 30
    %v12 = vld [vmem:[%s11] sm:$0x1]
    %13 = vrot.lane.b32.xlu0 %v12, 120
    %v14 = vpop.permute.xlu0 %13
    %vm15 = vcmask 1015744
    %16 = vst.msk [vmem:[#allocation0] sm:$0x1] %vm15, %v14
    %s17 = scalar_lea.vmem %s0, 29
    %v18 = vld [vmem:[%s17] sm:$0x1]
    %19 = vrot.lane.b32.xlu0 %v18, 116
    %v20 = vpop.permute.xlu0 %19
    %vm21 = vcmask 982944
    %22 = vst.msk [vmem:[#allocation0] sm:$0x1] %vm21, %v20
    %s23 = scalar_lea.vmem %s0, 28
    %v24 = vld [vmem:[%s23] sm:$0x1]
    %25 = vrot.lane.b32.xlu0 %v24, 112
    %v26 = vpop.permute.xlu0 %25
    %vm27 = vcmask 950144
    %28 = vst.msk [vmem:[#allocation0] sm:$0x1] %vm27, %v26
    %s29 = scalar_lea.vmem %s0, 27
    %v30 = vld [vmem:[%s29] sm:$0x1]
    %31 = vrot.lane.b32.xlu0 %v30, 108
    %v32 = vpop.permute.xlu0 %31
    %vm33 = vcmask 917344
    %34 = vst.msk [vmem:[#allocation0] sm:$0x1] %vm33, %v32
    %s35 = scalar_lea.vmem %s0, 26
    %v36 = vld [vmem:[%s35] sm:$0x1]
    %37 = vrot.lane.b32.xlu0 %v36, 104
    %v38 = vpop.permute.xlu0 %37
    %vm39 = vcmask 884544
    %40 = vst.msk [vmem:[#allocation0] sm:$0x1] %vm39, %v38
    %s41 = scalar_lea.vmem %s0, 25
    %v42 = vld [vmem:[%s41] sm:$0x1]
    %43 = vrot.lane.b32.xlu0 %v42, 100
    %v44 = vpop.permute.xlu0 %43
    %vm45 = vcmask 851744
    %46 = vst.msk [vmem:[#allocation0] sm:$0x1] %vm45, %v44
    %s47 = scalar_lea.vmem %s0, 24
    %v48 = vld [vmem:[%s47] sm:$0x1]
    %49 = vrot.lane.b32.xlu0 %v48, 96
    %v50 = vpop.permute.xlu0 %49
    %vm51 = vcmask 818944
    %52 = vst.msk [vmem:[#allocation0] sm:$0x1] %vm51, %v50
    %s53 = scalar_lea.vmem %s0, 23
    %v54 = vld [vmem:[%s53] sm:$0x1]
    %55 = vrot.lane.b32.xlu0 %v54, 92
    %v56 = vpop.permute.xlu0 %55
    %vm57 = vcmask 786144
    %58 = vst.msk [vmem:[#allocation0] sm:$0x1] %vm57, %v56
    %s59 = scalar_lea.vmem %s0, 22
    %v60 = vld [vmem:[%s59] sm:$0x1]
    %61 = vrot.lane.b32.xlu0 %v60, 88
    %v62 = vpop.permute.xlu0 %61
    %vm63 = vcmask 753344
    %64 = vst.msk [vmem:[#allocation0] sm:$0x1] %vm63, %v62
    %s65 = scalar_lea.vmem %s0, 21
    %v66 = vld [vmem:[%s65] sm:$0x1]
    %67 = vrot.lane.b32.xlu0 %v66, 84
    %v68 = vpop.permute.xlu0 %67
    %vm69 = vcmask 720544
    %70 = vst.msk [vmem:[#allocation0] sm:$0x1] %vm69, %v68
    %s71 = scalar_lea.vmem %s0, 20
    %v72 = vld [vmem:[%s71] sm:$0x1]
    %73 = vrot.lane.b32.xlu0 %v72, 80
    %v74 = vpop.permute.xlu0 %73
    %vm75 = vcmask 687744
    %76 = vst.msk [vmem:[#allocation0] sm:$0x1] %vm75, %v74
    %s77 = scalar_lea.vmem %s0, 19
    %v78 = vld [vmem:[%s77] sm:$0x1]
    %79 = vrot.lane.b32.xlu0 %v78, 76
    %v80 = vpop.permute.xlu0 %79
    %vm81 = vcmask 654944
    %82 = vst.msk [vmem:[#allocation0] sm:$0x1] %vm81, %v80
    %s83 = scalar_lea.vmem %s0, 18
    %v84 = vld [vmem:[%s83] sm:$0x1]
    %85 = vrot.lane.b32.xlu0 %v84, 72
    %v86 = vpop.permute.xlu0 %85
    %vm87 = vcmask 622144
    %88 = vst.msk [vmem:[#allocation0] sm:$0x1] %vm87, %v86
    %s89 = scalar_lea.vmem %s0, 17
    %v90 = vld [vmem:[%s89] sm:$0x1]
    %91 = vrot.lane.b32.xlu0 %v90, 68
    %v92 = vpop.permute.xlu0 %91
    %vm93 = vcmask 589344
    %94 = vst.msk [vmem:[#allocation0] sm:$0x1] %vm93, %v92
    %s95 = scalar_lea.vmem %s0, 16
    %v96 = vld [vmem:[%s95] sm:$0x1]
    %97 = vrot.lane.b32.xlu0 %v96, 64
    %v98 = vpop.permute.xlu0 %97
    %vm99 = vcmask 556544
    %100 = vst.msk [vmem:[#allocation0] sm:$0x1] %vm99, %v98
    %s101 = scalar_lea.vmem %s0, 15
    %v102 = vld [vmem:[%s101] sm:$0x1]
    %103 = vrot.lane.b32.xlu0 %v102, 60
    %v104 = vpop.permute.xlu0 %103
    %vm105 = vcmask 523744
    %106 = vst.msk [vmem:[#allocation0] sm:$0x1] %vm105, %v104
    %s107 = scalar_lea.vmem %s0, 14
    %v108 = vld [vmem:[%s107] sm:$0x1]
    %109 = vrot.lane.b32.xlu0 %v108, 56
    %v110 = vpop.permute.xlu0 %109
    %vm111 = vcmask 490944
    %112 = vst.msk [vmem:[#allocation0] sm:$0x1] %vm111, %v110
    %s113 = scalar_lea.vmem %s0, 13
    %v114 = vld [vmem:[%s113] sm:$0x1]
    %115 = vrot.lane.b32.xlu0 %v114, 52
    %v116 = vpop.permute.xlu0 %115
    %vm117 = vcmask 458144
    %118 = vst.msk [vmem:[#allocation0] sm:$0x1] %vm117, %v116
    %s119 = scalar_lea.vmem %s0, 12
    %v120 = vld [vmem:[%s119] sm:$0x1]
    %121 = vrot.lane.b32.xlu0 %v120, 48
    %v122 = vpop.permute.xlu0 %121
    %vm123 = vcmask 425344
    %124 = vst.msk [vmem:[#allocation0] sm:$0x1] %vm123, %v122
    %s125 = scalar_lea.vmem %s0, 11
    %v126 = vld [vmem:[%s125] sm:$0x1]
    %127 = vrot.lane.b32.xlu0 %v126, 44
    %v128 = vpop.permute.xlu0 %127
    %vm129 = vcmask 392544
    %130 = vst.msk [vmem:[#allocation0] sm:$0x1] %vm129, %v128
    %s131 = scalar_lea.vmem %s0, 10
    %v132 = vld [vmem:[%s131] sm:$0x1]
    %133 = vrot.lane.b32.xlu0 %v132, 40
    %v134 = vpop.permute.xlu0 %133
    %vm135 = vcmask 359744
    %136 = vst.msk [vmem:[#allocation0] sm:$0x1] %vm135, %v134
    %s137 = scalar_lea.vmem %s0, 9
    %v138 = vld [vmem:[%s137] sm:$0x1]
    %139 = vrot.lane.b32.xlu0 %v138, 36
    %v140 = vpop.permute.xlu0 %139
    %vm141 = vcmask 326944
    %142 = vst.msk [vmem:[#allocation0] sm:$0x1] %vm141, %v140
    %s143 = scalar_lea.vmem %s0, 8
    %v144 = vld [vmem:[%s143] sm:$0x1]
    %145 = vrot.lane.b32.xlu0 %v144, 32
    %v146 = vpop.permute.xlu0 %145
    %vm147 = vcmask 294144
    %148 = vst.msk [vmem:[#allocation0] sm:$0x1] %vm147, %v146
    %s149 = scalar_lea.vmem %s0, 7
    %v150 = vld [vmem:[%s149] sm:$0x1]
    %151 = vrot.lane.b32.xlu0 %v150, 28
    %v152 = vpop.permute.xlu0 %151
    %vm153 = vcmask 261344
    %154 = vst.msk [vmem:[#allocation0] sm:$0x1] %vm153, %v152
    %s155 = scalar_lea.vmem %s0, 6
    %v156 = vld [vmem:[%s155] sm:$0x1]
    %157 = vrot.lane.b32.xlu0 %v156, 24
    %v158 = vpop.permute.xlu0 %157
    %vm159 = vcmask 228544
    %160 = vst.msk [vmem:[#allocation0] sm:$0x1] %vm159, %v158
    %s161 = scalar_lea.vmem %s0, 5
    %v162 = vld [vmem:[%s161] sm:$0x1]
    %163 = vrot.lane.b32.xlu0 %v162, 20
    %v164 = vpop.permute.xlu0 %163
    %vm165 = vcmask 195744
    %166 = vst.msk [vmem:[#allocation0] sm:$0x1] %vm165, %v164
    %s167 = scalar_lea.vmem %s0, 4
    %v168 = vld [vmem:[%s167] sm:$0x1]
    %169 = vrot.lane.b32.xlu0 %v168, 16
    %v170 = vpop.permute.xlu0 %169
    %vm171 = vcmask 162944
    %172 = vst.msk [vmem:[#allocation0] sm:$0x1] %vm171, %v170
    %s173 = scalar_lea.vmem %s0, 3
    %v174 = vld [vmem:[%s173] sm:$0x1]
    %175 = vrot.lane.b32.xlu0 %v174, 12
    %v176 = vpop.permute.xlu0 %175
    %vm177 = vcmask 130144
    %178 = vst.msk [vmem:[#allocation0] sm:$0x1] %vm177, %v176
    %s179 = scalar_lea.vmem %s0, 2
    %v180 = vld [vmem:[%s179] sm:$0x1]
    %181 = vrot.lane.b32.xlu0 %v180, 8
    %v182 = vpop.permute.xlu0 %181
    %vm183 = vcmask 97344
    %184 = vst.msk [vmem:[#allocation0] sm:$0x1] %vm183, %v182
    %s185 = scalar_lea.vmem %s0, 1
    %v186 = vld [vmem:[%s185] sm:$0x1]
    %187 = vrot.lane.b32.xlu0 %v186, 4
    %v188 = vpop.permute.xlu0 %187
    %vm189 = vcmask 64544
    %190 = vst.msk [vmem:[#allocation0] sm:$0x1] %vm189, %v188
    %s192 = sshll.u32 1, 1
    %s193 = ssub.s32 %s192, 1
    %v195 = vld [vmem:[#allocation0] sm:%s193]
    %s196 = sshll.u32 1, 1
    %s197 = ssub.s32 %s196, 1
    %198 = vst [vmem:[%s1] sm:%s197] %v195

// kernel: resnet_block_forward.1
$region0: #{resnet_block_forward.1}
  #allocation0 [shape = 'u32[]', space=smem, size = 0x4, offset = 0x4, fixed_abs, tag = 'smem constant byte address 0x4 - core index']
  #allocation1 [shape = 'u32[144,128]{1,0:T(1,128)}', space=vmem, size = 0x12000, scoped, tag = 'internal scratch']
  %s0 = inlined_call_operand.vmem [shape: f32[16,128], index: 0, kind: input, shape index: {}]
  %s1 = inlined_call_operand.vmem [shape: bf16[3,128,128], index: 1, kind: input, shape index: {}]
  %s2 = inlined_call_operand.vmem [shape: f32[1,128], index: 2, kind: input, shape index: {}]
  %s3 = inlined_call_operand.vmem [shape: bf16[3,128,128], index: 3, kind: input, shape index: {}]
  %s4 = inlined_call_operand.vmem [shape: f32[1,128], index: 4, kind: input, shape index: {}]
  %s5 = inlined_call_operand.vmem [shape: f32[16,128], index: 5, kind: output, shape index: {}]
  %s6 = sld [smem:[#allocation0]]
  $region53: #{resnet_block_forward.1} parent=0
    _
  %s8 = ssub.s32 1, %s6
  %s9 = scalar_select 0, %s8, %s6
  loop: start=0, step=1, limit=4
  $region2: #{resnet_block_forward.1} parent=0 // loop_pre_header
    _
  $region3: #{resnet_block_forward.1} parent=0 // loop_header
    %s11 = sphi 0, %s15
    %p12 = scmp.ge.s32.totalorder %s11, 4
    %s21 = sphi 0, %s23
    %s24 = sphi 0, %s21
    %s25 = sphi 0, %s24
    %s41 = sphi 0, %s25
    %s45 = sphi 0, %s45
    %s47 = sphi 0, %s45
    %s48 = sphi 0, %s47
    %s62 = sphi 0, %s48
    %s66 = sphi 0, %s66
    %s68 = sphi 0, %s66
    %s69 = sphi 0, %s68
    %s83 = sphi 0, %s69
    %s87 = sphi 0, %s87
    %s89 = sphi 0, %s87
    %s90 = sphi 0, %s89
    %s104 = sphi 0, %s90
    %s108 = sphi 0, %s108
    %s110 = sphi 0, %s108
    %s111 = sphi 0, %s110
    %s125 = sphi 0, %s111
    %s131 = sphi 0, %s133
    %s134 = sphi 0, %s131
    %s135 = sphi 0, %s134
    %s151 = sphi 0, %s135
  $region4: #{resnet_block_forward.1} parent=0 // loop_header_branch
    %14 = sbr.rel (%p12) target = $region8
  $region5: #{resnet_block_forward.1} parent=0 // loop_body
    %s16 = ssub.s32 %s11, 1
    %s17 = ssub.s32 %s11, 2
    %s18 = sadd.s32 %s11, 1
    %s19 = ssub.s32 %s11, %s18
    %p20 = scmp.eq.s32.totalorder %s19, 0
    %s22 = sadd.s32 %s21, 1
    %s23 = scalar_select %p20, %s21, %s22
    %p26 = pneg %p20
    %p27 = scmp.eq.s32.totalorder %s11, 1
    %p28 = por %p26, %p27
    %p29 = scmp.ne.s32.totalorder %s21, %s24
    %p30 = scmp.eq.s32.totalorder %s11, 0
    %p31 = por %p29, %p30
    %p32 = scmp.ne.s32.totalorder %s21, %s24
    %p33 = scmp.eq.s32.totalorder %s16, 1
    %p34 = por %p32, %p33
    %p35 = scmp.ne.s32.totalorder %s24, %s25
    %p36 = scmp.eq.s32.totalorder %s16, 0
    %p37 = por %p35, %p36
    %p38 = scmp.ne.s32.totalorder %s24, %s25
    %p39 = scmp.eq.s32.totalorder %s17, 1
    %p40 = por %p38, %p39
    %p42 = scmp.ne.s32.totalorder %s25, %s41
    %p43 = scmp.eq.s32.totalorder %s17, 0
    %p44 = por %p42, %p43
    %s46 = sadd.s32 %s45, 1
    %p49 = scmp.eq.s32.totalorder %s11, 1
    %p50 = scmp.ne.s32.totalorder %s45, %s47
    %p51 = scmp.eq.s32.totalorder %s11, 0
    %p52 = por %p50, %p51
    %p53 = scmp.ne.s32.totalorder %s45, %s47
    %p54 = scmp.eq.s32.totalorder %s16, 1
    %p55 = por %p53, %p54
    %p56 = scmp.ne.s32.totalorder %s47, %s48
    %p57 = scmp.eq.s32.totalorder %s16, 0
    %p58 = por %p56, %p57
    %p59 = scmp.ne.s32.totalorder %s47, %s48
    %p60 = scmp.eq.s32.totalorder %s17, 1
    %p61 = por %p59, %p60
    %p63 = scmp.ne.s32.totalorder %s48, %s62
    %p64 = scmp.eq.s32.totalorder %s17, 0
    %p65 = por %p63, %p64
    %s67 = sadd.s32 %s66, 1
    %p70 = scmp.eq.s32.totalorder %s11, 1
    %p71 = scmp.ne.s32.totalorder %s66, %s68
    %p72 = scmp.eq.s32.totalorder %s11, 0
    %p73 = por %p71, %p72
    %p74 = scmp.ne.s32.totalorder %s66, %s68
    %p75 = scmp.eq.s32.totalorder %s16, 1
    %p76 = por %p74, %p75
    %p77 = scmp.ne.s32.totalorder %s68, %s69
    %p78 = scmp.eq.s32.totalorder %s16, 0
    %p79 = por %p77, %p78
    %p80 = scmp.ne.s32.totalorder %s68, %s69
    %p81 = scmp.eq.s32.totalorder %s17, 1
    %p82 = por %p80, %p81
    %p84 = scmp.ne.s32.totalorder %s69, %s83
    %p85 = scmp.eq.s32.totalorder %s17, 0
    %p86 = por %p84, %p85
    %s88 = sadd.s32 %s87, 1
    %p91 = scmp.eq.s32.totalorder %s11, 1
    %p92 = scmp.ne.s32.totalorder %s87, %s89
    %p93 = scmp.eq.s32.totalorder %s11, 0
    %p94 = por %p92, %p93
    %p95 = scmp.ne.s32.totalorder %s87, %s89
    %p96 = scmp.eq.s32.totalorder %s16, 1
    %p97 = por %p95, %p96
    %p98 = scmp.ne.s32.totalorder %s89, %s90
    %p99 = scmp.eq.s32.totalorder %s16, 0
    %p100 = por %p98, %p99
    %p101 = scmp.ne.s32.totalorder %s89, %s90
    %p102 = scmp.eq.s32.totalorder %s17, 1
    %p103 = por %p101, %p102
    %p105 = scmp.ne.s32.totalorder %s90, %s104
    %p106 = scmp.eq.s32.totalorder %s17, 0
    %p107 = por %p105, %p106
    %s109 = sadd.s32 %s108, 1
    %p112 = scmp.eq.s32.totalorder %s11, 1
    %p113 = scmp.ne.s32.totalorder %s108, %s110
    %p114 = scmp.eq.s32.totalorder %s11, 0
    %p115 = por %p113, %p114
    %p116 = scmp.ne.s32.totalorder %s108, %s110
    %p117 = scmp.eq.s32.totalorder %s16, 1
    %p118 = por %p116, %p117
    %p119 = scmp.ne.s32.totalorder %s110, %s111
    %p120 = scmp.eq.s32.totalorder %s16, 0
    %p121 = por %p119, %p120
    %p122 = scmp.ne.s32.totalorder %s110, %s111
    %p123 = scmp.eq.s32.totalorder %s17, 1
    %p124 = por %p122, %p123
    %p126 = scmp.ne.s32.totalorder %s111, %s125
    %p127 = scmp.eq.s32.totalorder %s17, 0
    %p128 = por %p126, %p127
    %s129 = ssub.s32 %s11, %s18
    %p130 = scmp.eq.s32.totalorder %s129, 0
    %s132 = sadd.s32 %s131, 1
    %s133 = scalar_select %p130, %s131, %s132
    %p136 = pneg %p130
    %p137 = scmp.eq.s32.totalorder %s11, 1
    %p138 = por %p136, %p137
    %p139 = scmp.ne.s32.totalorder %s131, %s134
    %p140 = scmp.eq.s32.totalorder %s11, 0
    %p141 = por %p139, %p140
    %p142 = scmp.ne.s32.totalorder %s131, %s134
    %p143 = scmp.eq.s32.totalorder %s16, 1
    %p144 = por %p142, %p143
    %p145 = scmp.ne.s32.totalorder %s134, %s135
    %p146 = scmp.eq.s32.totalorder %s16, 0
    %p147 = por %p145, %p146
    %p148 = scmp.ne.s32.totalorder %s134, %s135
    %p149 = scmp.eq.s32.totalorder %s17, 1
    %p150 = por %p148, %p149
    %p152 = scmp.ne.s32.totalorder %s135, %s151
    %p153 = scmp.eq.s32.totalorder %s17, 0
    %p154 = por %p152, %p153
    %p155 = scmp.le.s32.totalorder 1, %s11
    %p156 = scmp.lt.s32.totalorder %s11, 3
    %p157 = pnand %p155, %p156
    %p158 = pneg %p157
    // Predicated region
    $region9: #{resnet_block_forward.1} parent=5 // pred_check
      _
    $region10: #{resnet_block_forward.1} parent=5 // pred_check_branch
      %160 = sbr.rel (%p157) target = $region12
    $region11: #{resnet_block_forward.1} parent=5 // pred_region
      %s161 = ssub.s32 %s11, 1
      // Predicated region
      $region13: #{resnet_block_forward.1} parent=11 // pred_check
        %p162 = pneg %p58
      $region14: #{resnet_block_forward.1} parent=11 // pred_check_branch
        %164 = sbr.rel (%p162) target = $region16
      $region15: #{resnet_block_forward.1} parent=11 // pred_region
        _
      $region16: #{resnet_block_forward.1} parent=11 // pred_fallthru
        _
      // Predicated region
      $region17: #{resnet_block_forward.1} parent=11 // pred_check
        %p165 = pneg %p79
      $region18: #{resnet_block_forward.1} parent=11 // pred_check_branch
        %167 = sbr.rel (%p165) target = $region20
      $region19: #{resnet_block_forward.1} parent=11 // pred_region
        _
      $region20: #{resnet_block_forward.1} parent=11 // pred_fallthru
        _
      // Predicated region
      $region21: #{resnet_block_forward.1} parent=11 // pred_check
        %p168 = pneg %p100
      $region22: #{resnet_block_forward.1} parent=11 // pred_check_branch
        %170 = sbr.rel (%p168) target = $region24
      $region23: #{resnet_block_forward.1} parent=11 // pred_region
        _
      $region24: #{resnet_block_forward.1} parent=11 // pred_fallthru
        _
      // Predicated region
      $region25: #{resnet_block_forward.1} parent=11 // pred_check
        %p171 = pneg %p121
      $region26: #{resnet_block_forward.1} parent=11 // pred_check_branch
        %173 = sbr.rel (%p171) target = $region28
      $region27: #{resnet_block_forward.1} parent=11 // pred_region
        _
      $region28: #{resnet_block_forward.1} parent=11 // pred_fallthru
        _
    $region12: #{resnet_block_forward.1} parent=5 // pred_fallthru
      _
    %p174 = scmp.lt.s32.totalorder %s11, 2
    // Predicated region
    $region29: #{resnet_block_forward.1} parent=5 // pred_check
      %p175 = pneg %p174
    $region30: #{resnet_block_forward.1} parent=5 // pred_check_branch
      %177 = sbr.rel (%p175) target = $region32
    $region31: #{resnet_block_forward.1} parent=5 // pred_region
      // Predicated region
      $region33: #{resnet_block_forward.1} parent=31 // pred_check
        %p178 = pneg %p31
      $region34: #{resnet_block_forward.1} parent=31 // pred_check_branch
        %180 = sbr.rel (%p178) target = $region36
      $region35: #{resnet_block_forward.1} parent=31 // pred_region
        %p181 = scmp.lt.s32.totalorder %s11, 1
        %s182 = scalar_select %p181, %s11, 1
        %s183 = smul.addr %s182, 8
        %s184 = scalar_lea.vmem %s0, %s183
      $region36: #{resnet_block_forward.1} parent=31 // pred_fallthru
        _
    $region32: #{resnet_block_forward.1} parent=5 // pred_fallthru
      _
    %p185 = scmp.le.s32.totalorder 1, %s11
    %p186 = scmp.lt.s32.totalorder %s11, 3
    %p187 = pnand %p185, %p186
    %p188 = pneg %p187
    // Predicated region
    $region37: #{resnet_block_forward.1} parent=5 // pred_check
      _
    $region38: #{resnet_block_forward.1} parent=5 // pred_check_branch
      %190 = sbr.rel (%p187) target = $region40
    $region39: #{resnet_block_forward.1} parent=5 // pred_region
      %s191 = ssub.s32 %s11, 1
      %p192 = scmp.lt.s32.totalorder %s16, 1
      %s193 = scalar_select %p192, %s16, 1
      %s194 = smul.addr %s193, 8
      %s195 = scalar_lea.vmem %s0, %s194
      %p196 = pneg %p37
      %p197 = pneg %p34
      %p198 = pneg %p58
      %p199 = pneg %p55
      %p200 = pneg %p79
      %p201 = pneg %p76
      %p202 = pneg %p100
      %p203 = pneg %p97
      %p204 = pneg %p121
      %p205 = pneg %p118
      %p206 = pneg %p147
      %p207 = pneg %p144
      %p208 = scmp.lt.s32.totalorder %s16, 1
      %s209 = scalar_select %p208, %s16, 1
      %s210 = smul.addr %s209, 8
      %s211 = scalar_lea.vmem %s5, %s210
      %p212 = scmp.lt.s32.totalorder %s16, 1
      %s213 = scalar_select %p212, %s16, 1
      %s214 = smul.addr %s213, 8
      %s215 = scalar_lea.vmem %s0, %s214
      %p216 = scmp.lt.s32.totalorder %s16, 1
      %s217 = scalar_select %p216, %s16, 1
      %s218 = smul.addr %s217, 8
      %s219 = scalar_lea.vmem %s5, %s218
      %v221 = vld [vmem:[%s215] sm:$0xff]
      %v222 = vlaneseq
      %v223 = vshrl.u32 %v222, 7
      %vm224 = vcmp.lt.s32.totalorder %v223, 0
      %v225 = vsub.s32 0, %v223
      %v226 = vsel %vm224, %v225, %v223
      %v227 = vshrl.u32 %v226, 3
      %v228 = vand.u32 %v226, 7
      %v229 = vsub.s32 0, %v228
      %v230 = vsel %vm224, %v229, %v228
      %vm231 = vcmp.ne.s32.totalorder %v230, 0
      %vm232 = vcmp.lt.s32.totalorder %v230, 0
      %vm233 = vmand %vm232, %vm231
      %v234 = vadd.s32 %v230, 8
      %v235 = vsel %vm233, %v234, %v230
      %vm236 = vcmp.ne.s32.totalorder %v235, 0
      %vm237 = vcmp.ne.s32.totalorder %v235, 7
      %v238 = vrot.slane %v221, 7
      %v239 = vsel %vm236, 1, 0
      %vm240 = vcmp.eq.s32.totalorder %v239, 1
      %v241 = vsel %vm240, %v238, 0.0
      %v242 = vrot.slane %v221, 1
      %v243 = vsel %vm237, 1, 0
      %vm244 = vcmp.eq.s32.totalorder %v243, 1
      %v245 = vsel %vm244, %v242, 0.0
      %v246 = vpack.c.bf16 %v241, %v241
      %v247 = vld [vmem:[%s1] sm:$0xf]
      %v248 = vld [vmem:[%s1 + $0x4] sm:$0xf]
      %v249 = vld [vmem:[%s1 + $0x8] sm:$0xf]
      %v250 = vld [vmem:[%s1 + $0xc] sm:$0xf]
      %v251 = vld [vmem:[%s1 + $0x10] sm:$0xf]
      %v252 = vld [vmem:[%s1 + $0x14] sm:$0xf]
      %v253 = vld [vmem:[%s1 + $0x18] sm:$0xf]
      %v254 = vld [vmem:[%s1 + $0x1c] sm:$0xf]
      %v255 = vld [vmem:[%s1 + $0x20] sm:$0xf]
      %v256 = vld [vmem:[%s1 + $0x24] sm:$0xf]
      %v257 = vld [vmem:[%s1 + $0x28] sm:$0xf]
      %v258 = vld [vmem:[%s1 + $0x2c] sm:$0xf]
      %v259 = vld [vmem:[%s1 + $0x30] sm:$0xf]
      %v260 = vld [vmem:[%s1 + $0x34] sm:$0xf]
      %v261 = vld [vmem:[%s1 + $0x38] sm:$0xf]
      %v262 = vld [vmem:[%s1 + $0x3c] sm:$0xf]
      %v263 = vpack.c.bf16 %v221, %v221
      %s264 = scalar_lea.vmem %s1, 64
      %v265 = vld [vmem:[%s264] sm:$0xf]
      %v266 = vld [vmem:[%s264 + $0x4] sm:$0xf]
      %v267 = vld [vmem:[%s264 + $0x8] sm:$0xf]
      %v268 = vld [vmem:[%s264 + $0xc] sm:$0xf]
      %v269 = vld [vmem:[%s264 + $0x10] sm:$0xf]
      %v270 = vld [vmem:[%s264 + $0x14] sm:$0xf]
      %v271 = vld [vmem:[%s264 + $0x18] sm:$0xf]
      %v272 = vld [vmem:[%s264 + $0x1c] sm:$0xf]
      %v273 = vld [vmem:[%s264 + $0x20] sm:$0xf]
      %v274 = vld [vmem:[%s264 + $0x24] sm:$0xf]
      %v275 = vld [vmem:[%s264 + $0x28] sm:$0xf]
      %v276 = vld [vmem:[%s264 + $0x2c] sm:$0xf]
      %v277 = vld [vmem:[%s264 + $0x30] sm:$0xf]
      %v278 = vld [vmem:[%s264 + $0x34] sm:$0xf]
      %v279 = vld [vmem:[%s264 + $0x38] sm:$0xf]
      %v280 = vld [vmem:[%s264 + $0x3c] sm:$0xf]
      %v297 = vunpack.c.l.b16 %v265
      %v298 = vunpack.c.l.b16 %v266
      %v299 = vunpack.c.l.b16 %v267
      %v300 = vunpack.c.l.b16 %v268
      %v301 = vunpack.c.l.b16 %v269
      %v302 = vunpack.c.l.b16 %v270
      %v303 = vunpack.c.l.b16 %v271
      %v304 = vunpack.c.l.b16 %v272
      %v305 = vunpack.c.l.b16 %v273
      %v306 = vunpack.c.l.b16 %v274
      %v307 = vunpack.c.l.b16 %v275
      %v308 = vunpack.c.l.b16 %v276
      %v309 = vunpack.c.l.b16 %v277
      %v310 = vunpack.c.l.b16 %v278
      %v311 = vunpack.c.l.b16 %v279
      %v312 = vunpack.c.l.b16 %v280
      %v313 = vpack.c.b16 %v298, %v297
      %v314 = vpack.c.b16 %v300, %v299
      %v315 = vpack.c.b16 %v302, %v301
      %v316 = vpack.c.b16 %v304, %v303
      %v317 = vpack.c.b16 %v306, %v305
      %v318 = vpack.c.b16 %v308, %v307
      %v319 = vpack.c.b16 %v310, %v309
      %v320 = vpack.c.b16 %v312, %v311
      %329 = vmatprep.subr.bf16.mxu0 0
      %330 = vmatpush1.bf16.msra.mxu0 %v320
      %331 = vmatprep.subr.bf16.mxu0 0
      %332 = vmatpush1.bf16.msra.mxu0 %v319
      %333 = vmatprep.subr.bf16.mxu0 0
      %334 = vmatpush1.bf16.msra.mxu0 %v318
      %335 = vmatprep.subr.bf16.mxu0 0
      %336 = vmatpush1.bf16.msra.mxu0 %v317
      %337 = vmatprep.subr.bf16.mxu0 0
      %338 = vmatpush1.bf16.msra.mxu0 %v316
      %339 = vmatprep.subr.bf16.mxu0 0
      %340 = vmatpush1.bf16.msra.mxu0 %v315
      %341 = vmatprep.subr.bf16.mxu0 0
      %342 = vmatpush1.bf16.msra.mxu0 %v314
      %343 = vmatprep.subr.bf16.mxu0 0
      %344 = vmatpush1.bf16.msra.mxu0 %v313
      %345 = vmatprep.subr.bf16.mxu0 0
      %346 = vmatpush2.bf16.msra.mxu0 0
      %347 = vmatprep.subr.bf16.mxu0 0
      %348 = vmatpush2.bf16.msra.mxu0 0
      %349 = vmatprep.subr.bf16.mxu0 0
      %350 = vmatpush2.bf16.msra.mxu0 0
      %351 = vmatprep.subr.bf16.mxu0 0
      %352 = vmatpush2.bf16.msra.mxu0 0
      %353 = vmatprep.subr.bf16.mxu0 0
      %354 = vmatpush2.bf16.msra.mxu0 0
      %355 = vmatprep.subr.bf16.mxu0 0
      %356 = vmatpush2.bf16.msra.mxu0 0
      %357 = vmatprep.subr.bf16.mxu0 0
      %358 = vmatpush2.bf16.msra.mxu0 0
      %359 = vmatprep.subr.bf16.mxu0 0
      %360 = vmatpush2.bf16.msra.mxu0 0
      %361 = vmatprep.mubr.bf16.mxu0 0
      %362 = vmatmul.mubr.bf16.gmra.mxu0 %v263
      %v363 = vpop.f32.mrf.mxu0
      %v364 = vadd.f32 0.0, %v363
      %v365 = vpop.f32.mrf.mxu0
      %v366 = vpop.f32.mrf.mxu0
      %v367 = vpop.f32.mrf.mxu0
      %368 = vdwg.mxu0
      %v385 = vunpack.c.l.b16 %v247
      %v386 = vunpack.c.l.b16 %v248
      %v387 = vunpack.c.l.b16 %v249
      %v388 = vunpack.c.l.b16 %v250
      %v389 = vunpack.c.l.b16 %v251
      %v390 = vunpack.c.l.b16 %v252
      %v391 = vunpack.c.l.b16 %v253
      %v392 = vunpack.c.l.b16 %v254
      %v393 = vunpack.c.l.b16 %v255
      %v394 = vunpack.c.l.b16 %v256
      %v395 = vunpack.c.l.b16 %v257
      %v396 = vunpack.c.l.b16 %v258
      %v397 = vunpack.c.l.b16 %v259
      %v398 = vunpack.c.l.b16 %v260
      %v399 = vunpack.c.l.b16 %v261
      %v400 = vunpack.c.l.b16 %v262
      %v401 = vpack.c.b16 %v386, %v385
      %v402 = vpack.c.b16 %v388, %v387
      %v403 = vpack.c.b16 %v390, %v389
      %v404 = vpack.c.b16 %v392, %v391
      %v405 = vpack.c.b16 %v394, %v393
      %v406 = vpack.c.b16 %v396, %v395
      %v407 = vpack.c.b16 %v398, %v397
      %v408 = vpack.c.b16 %v400, %v399
      %417 = vmatprep.subr.bf16.mxu0 0
      %418 = vmatpush1.bf16.msra.mxu0 %v408
      %419 = vmatprep.subr.bf16.mxu0 0
      %420 = vmatpush1.bf16.msra.mxu0 %v407
      %421 = vmatprep.subr.bf16.mxu0 0
      %422 = vmatpush1.bf16.msra.mxu0 %v406
      %423 = vmatprep.subr.bf16.mxu0 0
      %424 = vmatpush1.bf16.msra.mxu0 %v405
      %425 = vmatprep.subr.bf16.mxu0 0
      %426 = vmatpush1.bf16.msra.mxu0 %v404
      %427 = vmatprep.subr.bf16.mxu0 0
      %428 = vmatpush1.bf16.msra.mxu0 %v403
      %429 = vmatprep.subr.bf16.mxu0 0
      %430 = vmatpush1.bf16.msra.mxu0 %v402
      %431 = vmatprep.subr.bf16.mxu0 0
      %432 = vmatpush1.bf16.msra.mxu0 %v401
      %433 = vmatprep.subr.bf16.mxu0 0
      %434 = vmatpush2.bf16.msra.mxu0 0
      %435 = vmatprep.subr.bf16.mxu0 0
      %436 = vmatpush2.bf16.msra.mxu0 0
      %437 = vmatprep.subr.bf16.mxu0 0
      %438 = vmatpush2.bf16.msra.mxu0 0
      %439 = vmatprep.subr.bf16.mxu0 0
      %440 = vmatpush2.bf16.msra.mxu0 0
      %441 = vmatprep.subr.bf16.mxu0 0
      %442 = vmatpush2.bf16.msra.mxu0 0
      %443 = vmatprep.subr.bf16.mxu0 0
      %444 = vmatpush2.bf16.msra.mxu0 0
      %445 = vmatprep.subr.bf16.mxu0 0
      %446 = vmatpush2.bf16.msra.mxu0 0
      %447 = vmatprep.subr.bf16.mxu0 0
      %448 = vmatpush2.bf16.msra.mxu0 0
      %449 = vmatprep.mubr.bf16.mxu0 0
      %450 = vmatmul.mubr.bf16.gmra.mxu0 %v246
      %v451 = vpop.f32.mrf.mxu0
      %v452 = vadd.f32 %v364, %v451
      %v453 = vpop.f32.mrf.mxu0
      %v454 = vpop.f32.mrf.mxu0
      %v455 = vpop.f32.mrf.mxu0
      %456 = vdwg.mxu0
      %v457 = vpack.c.bf16 %v245, %v245
      %s458 = scalar_lea.vmem %s1, 128
      %v459 = vld [vmem:[%s458] sm:$0xf]
      %v460 = vld [vmem:[%s458 + $0x4] sm:$0xf]
      %v461 = vld [vmem:[%s458 + $0x8] sm:$0xf]
      %v462 = vld [vmem:[%s458 + $0xc] sm:$0xf]
      %v463 = vld [vmem:[%s458 + $0x10] sm:$0xf]
      %v464 = vld [vmem:[%s458 + $0x14] sm:$0xf]
      %v465 = vld [vmem:[%s458 + $0x18] sm:$0xf]
      %v466 = vld [vmem:[%s458 + $0x1c] sm:$0xf]
      %v467 = vld [vmem:[%s458 + $0x20] sm:$0xf]
      %v468 = vld [vmem:[%s458 + $0x24] sm:$0xf]
      %v469 = vld [vmem:[%s458 + $0x28] sm:$0xf]
      %v470 = vld [vmem:[%s458 + $0x2c] sm:$0xf]
      %v471 = vld [vmem:[%s458 + $0x30] sm:$0xf]
      %v472 = vld [vmem:[%s458 + $0x34] sm:$0xf]
      %v473 = vld [vmem:[%s458 + $0x38] sm:$0xf]
      %v474 = vld [vmem:[%s458 + $0x3c] sm:$0xf]
      %v491 = vunpack.c.l.b16 %v459
      %v492 = vunpack.c.l.b16 %v460
      %v493 = vunpack.c.l.b16 %v461
      %v494 = vunpack.c.l.b16 %v462
      %v495 = vunpack.c.l.b16 %v463
      %v496 = vunpack.c.l.b16 %v464
      %v497 = vunpack.c.l.b16 %v465
      %v498 = vunpack.c.l.b16 %v466
      %v499 = vunpack.c.l.b16 %v467
      %v500 = vunpack.c.l.b16 %v468
      %v501 = vunpack.c.l.b16 %v469
      %v502 = vunpack.c.l.b16 %v470
      %v503 = vunpack.c.l.b16 %v471
      %v504 = vunpack.c.l.b16 %v472
      %v505 = vunpack.c.l.b16 %v473
      %v506 = vunpack.c.l.b16 %v474
      %v507 = vpack.c.b16 %v492, %v491
      %v508 = vpack.c.b16 %v494, %v493
      %v509 = vpack.c.b16 %v496, %v495
      %v510 = vpack.c.b16 %v498, %v497
      %v511 = vpack.c.b16 %v500, %v499
      %v512 = vpack.c.b16 %v502, %v501
      %v513 = vpack.c.b16 %v504, %v503
      %v514 = vpack.c.b16 %v506, %v505
      %523 = vmatprep.subr.bf16.mxu0 0
      %524 = vmatpush1.bf16.msra.mxu0 %v514
      %525 = vmatprep.subr.bf16.mxu0 0
      %526 = vmatpush1.bf16.msra.mxu0 %v513
      %527 = vmatprep.subr.bf16.mxu0 0
      %528 = vmatpush1.bf16.msra.mxu0 %v512
      %529 = vmatprep.subr.bf16.mxu0 0
      %530 = vmatpush1.bf16.msra.mxu0 %v511
      %531 = vmatprep.subr.bf16.mxu0 0
      %532 = vmatpush1.bf16.msra.mxu0 %v510
      %533 = vmatprep.subr.bf16.mxu0 0
      %534 = vmatpush1.bf16.msra.mxu0 %v509
      %535 = vmatprep.subr.bf16.mxu0 0
      %536 = vmatpush1.bf16.msra.mxu0 %v508
      %537 = vmatprep.subr.bf16.mxu0 0
      %538 = vmatpush1.bf16.msra.mxu0 %v507
      %539 = vmatprep.subr.bf16.mxu0 0
      %540 = vmatpush2.bf16.msra.mxu0 0
      %541 = vmatprep.subr.bf16.mxu0 0
      %542 = vmatpush2.bf16.msra.mxu0 0
      %543 = vmatprep.subr.bf16.mxu0 0
      %544 = vmatpush2.bf16.msra.mxu0 0
      %545 = vmatprep.subr.bf16.mxu0 0
      %546 = vmatpush2.bf16.msra.mxu0 0
      %547 = vmatprep.subr.bf16.mxu0 0
      %548 = vmatpush2.bf16.msra.mxu0 0
      %549 = vmatprep.subr.bf16.mxu0 0
      %550 = vmatpush2.bf16.msra.mxu0 0
      %551 = vmatprep.subr.bf16.mxu0 0
      %552 = vmatpush2.bf16.msra.mxu0 0
      %553 = vmatprep.subr.bf16.mxu0 0
      %554 = vmatpush2.bf16.msra.mxu0 0
      %555 = vmatprep.mubr.bf16.mxu0 0
      %556 = vmatmul.mubr.bf16.gmra.mxu0 %v457
      %v557 = vpop.f32.mrf.mxu0
      %v558 = vadd.f32 0.0, %v557
      %v559 = vpop.f32.mrf.mxu0
      %v560 = vpop.f32.mrf.mxu0
      %v561 = vpop.f32.mrf.mxu0
      %562 = vdwg.mxu0
      %v563 = vadd.f32 %v452, %v558
      %v564 = vld [vmem:[%s2] sm:$0x1]
      %v566 = vlaneseq
      %v567 = vshrl.u32 %v566, 7
      %v568 = vsub.s32 0, %v567
      %v569 = vrot.slane %v564, %v568
      %v571 = vadd.f32 %v563, %v569
      %vm572 = vcmp.gt.f32.partialorder %v571, 0.0
      %v573 = vmul.f32 %v571, 0.01
      %v574 = vsel %vm572, %v571, %v573
      %v575 = vrot.slane %v574, 7
      %v576 = vsel %vm240, %v575, 0.0
      %v577 = vrot.slane %v574, 1
      %v578 = vsel %vm244, %v577, 0.0
      %v579 = vpack.c.bf16 %v576, %v576
      %v580 = vld [vmem:[%s3] sm:$0xf]
      %v581 = vld [vmem:[%s3 + $0x4] sm:$0xf]
      %v582 = vld [vmem:[%s3 + $0x8] sm:$0xf]
      %v583 = vld [vmem:[%s3 + $0xc] sm:$0xf]
      %v584 = vld [vmem:[%s3 + $0x10] sm:$0xf]
      %v585 = vld [vmem:[%s3 + $0x14] sm:$0xf]
      %v586 = vld [vmem:[%s3 + $0x18] sm:$0xf]
      %v587 = vld [vmem:[%s3 + $0x1c] sm:$0xf]
      %v588 = vld [vmem:[%s3 + $0x20] sm:$0xf]
      %v589 = vld [vmem:[%s3 + $0x24] sm:$0xf]
      %v590 = vld [vmem:[%s3 + $0x28] sm:$0xf]
      %v591 = vld [vmem:[%s3 + $0x2c] sm:$0xf]
      %v592 = vld [vmem:[%s3 + $0x30] sm:$0xf]
      %v593 = vld [vmem:[%s3 + $0x34] sm:$0xf]
      %v594 = vld [vmem:[%s3 + $0x38] sm:$0xf]
      %v595 = vld [vmem:[%s3 + $0x3c] sm:$0xf]
      %v596 = vpack.c.bf16 %v574, %v574
      %s597 = scalar_lea.vmem %s3, 64
      %v598 = vld [vmem:[%s597] sm:$0xf]
      %v599 = vld [vmem:[%s597 + $0x4] sm:$0xf]
      %v600 = vld [vmem:[%s597 + $0x8] sm:$0xf]
      %v601 = vld [vmem:[%s597 + $0xc] sm:$0xf]
      %v602 = vld [vmem:[%s597 + $0x10] sm:$0xf]
      %v603 = vld [vmem:[%s597 + $0x14] sm:$0xf]
      %v604 = vld [vmem:[%s597 + $0x18] sm:$0xf]
      %v605 = vld [vmem:[%s597 + $0x1c] sm:$0xf]
      %v606 = vld [vmem:[%s597 + $0x20] sm:$0xf]
      %v607 = vld [vmem:[%s597 + $0x24] sm:$0xf]
      %v608 = vld [vmem:[%s597 + $0x28] sm:$0xf]
      %v609 = vld [vmem:[%s597 + $0x2c] sm:$0xf]
      %v610 = vld [vmem:[%s597 + $0x30] sm:$0xf]
      %v611 = vld [vmem:[%s597 + $0x34] sm:$0xf]
      %v612 = vld [vmem:[%s597 + $0x38] sm:$0xf]
      %v613 = vld [vmem:[%s597 + $0x3c] sm:$0xf]
      %v630 = vunpack.c.l.b16 %v598
      %v631 = vunpack.c.l.b16 %v599
      %v632 = vunpack.c.l.b16 %v600
      %v633 = vunpack.c.l.b16 %v601
      %v634 = vunpack.c.l.b16 %v602
      %v635 = vunpack.c.l.b16 %v603
      %v636 = vunpack.c.l.b16 %v604
      %v637 = vunpack.c.l.b16 %v605
      %v638 = vunpack.c.l.b16 %v606
      %v639 = vunpack.c.l.b16 %v607
      %v640 = vunpack.c.l.b16 %v608
      %v641 = vunpack.c.l.b16 %v609
      %v642 = vunpack.c.l.b16 %v610
      %v643 = vunpack.c.l.b16 %v611
      %v644 = vunpack.c.l.b16 %v612
      %v645 = vunpack.c.l.b16 %v613
      %v646 = vpack.c.b16 %v631, %v630
      %v647 = vpack.c.b16 %v633, %v632
      %v648 = vpack.c.b16 %v635, %v634
      %v649 = vpack.c.b16 %v637, %v636
      %v650 = vpack.c.b16 %v639, %v638
      %v651 = vpack.c.b16 %v641, %v640
      %v652 = vpack.c.b16 %v643, %v642
      %v653 = vpack.c.b16 %v645, %v644
      %662 = vmatprep.subr.bf16.mxu0 0
      %663 = vmatpush1.bf16.msra.mxu0 %v653
      %664 = vmatprep.subr.bf16.mxu0 0
      %665 = vmatpush1.bf16.msra.mxu0 %v652
      %666 = vmatprep.subr.bf16.mxu0 0
      %667 = vmatpush1.bf16.msra.mxu0 %v651
      %668 = vmatprep.subr.bf16.mxu0 0
      %669 = vmatpush1.bf16.msra.mxu0 %v650
      %670 = vmatprep.subr.bf16.mxu0 0
      %671 = vmatpush1.bf16.msra.mxu0 %v649
      %672 = vmatprep.subr.bf16.mxu0 0
      %673 = vmatpush1.bf16.msra.mxu0 %v648
      %674 = vmatprep.subr.bf16.mxu0 0
      %675 = vmatpush1.bf16.msra.mxu0 %v647
      %676 = vmatprep.subr.bf16.mxu0 0
      %677 = vmatpush1.bf16.msra.mxu0 %v646
      %678 = vmatprep.subr.bf16.mxu0 0
      %679 = vmatpush2.bf16.msra.mxu0 0
      %680 = vmatprep.subr.bf16.mxu0 0
      %681 = vmatpush2.bf16.msra.mxu0 0
      %682 = vmatprep.subr.bf16.mxu0 0
      %683 = vmatpush2.bf16.msra.mxu0 0
      %684 = vmatprep.subr.bf16.mxu0 0
      %685 = vmatpush2.bf16.msra.mxu0 0
      %686 = vmatprep.subr.bf16.mxu0 0
      %687 = vmatpush2.bf16.msra.mxu0 0
      %688 = vmatprep.subr.bf16.mxu0 0
      %689 = vmatpush2.bf16.msra.mxu0 0
      %690 = vmatprep.subr.bf16.mxu0 0
      %691 = vmatpush2.bf16.msra.mxu0 0
      %692 = vmatprep.subr.bf16.mxu0 0
      %693 = vmatpush2.bf16.msra.mxu0 0
      %694 = vmatprep.mubr.bf16.mxu0 0
      %695 = vmatmul.mubr.bf16.gmra.mxu0 %v596
      %v696 = vpop.f32.mrf.mxu0
      %v697 = vadd.f32 0.0, %v696
      %v698 = vpop.f32.mrf.mxu0
      %v699 = vpop.f32.mrf.mxu0
      %v700 = vpop.f32.mrf.mxu0
      %701 = vdwg.mxu0
      %v718 = vunpack.c.l.b16 %v580
      %v719 = vunpack.c.l.b16 %v581
      %v720 = vunpack.c.l.b16 %v582
      %v721 = vunpack.c.l.b16 %v583
      %v722 = vunpack.c.l.b16 %v584
      %v723 = vunpack.c.l.b16 %v585
      %v724 = vunpack.c.l.b16 %v586
      %v725 = vunpack.c.l.b16 %v587
      %v726 = vunpack.c.l.b16 %v588
      %v727 = vunpack.c.l.b16 %v589
      %v728 = vunpack.c.l.b16 %v590
      %v729 = vunpack.c.l.b16 %v591
      %v730 = vunpack.c.l.b16 %v592
      %v731 = vunpack.c.l.b16 %v593
      %v732 = vunpack.c.l.b16 %v594
      %v733 = vunpack.c.l.b16 %v595
      %v734 = vpack.c.b16 %v719, %v718
      %v735 = vpack.c.b16 %v721, %v720
      %v736 = vpack.c.b16 %v723, %v722
      %v737 = vpack.c.b16 %v725, %v724
      %v738 = vpack.c.b16 %v727, %v726
      %v739 = vpack.c.b16 %v729, %v728
      %v740 = vpack.c.b16 %v731, %v730
      %v741 = vpack.c.b16 %v733, %v732
      %750 = vmatprep.subr.bf16.mxu0 0
      %751 = vmatpush1.bf16.msra.mxu0 %v741
      %752 = vmatprep.subr.bf16.mxu0 0
      %753 = vmatpush1.bf16.msra.mxu0 %v740
      %754 = vmatprep.subr.bf16.mxu0 0
      %755 = vmatpush1.bf16.msra.mxu0 %v739
      %756 = vmatprep.subr.bf16.mxu0 0
      %757 = vmatpush1.bf16.msra.mxu0 %v738
      %758 = vmatprep.subr.bf16.mxu0 0
      %759 = vmatpush1.bf16.msra.mxu0 %v737
      %760 = vmatprep.subr.bf16.mxu0 0
      %761 = vmatpush1.bf16.msra.mxu0 %v736
      %762 = vmatprep.subr.bf16.mxu0 0
      %763 = vmatpush1.bf16.msra.mxu0 %v735
      %764 = vmatprep.subr.bf16.mxu0 0
      %765 = vmatpush1.bf16.msra.mxu0 %v734
      %766 = vmatprep.subr.bf16.mxu0 0
      %767 = vmatpush2.bf16.msra.mxu0 0
      %768 = vmatprep.subr.bf16.mxu0 0
      %769 = vmatpush2.bf16.msra.mxu0 0
      %770 = vmatprep.subr.bf16.mxu0 0
      %771 = vmatpush2.bf16.msra.mxu0 0
      %772 = vmatprep.subr.bf16.mxu0 0
      %773 = vmatpush2.bf16.msra.mxu0 0
      %774 = vmatprep.subr.bf16.mxu0 0
      %775 = vmatpush2.bf16.msra.mxu0 0
      %776 = vmatprep.subr.bf16.mxu0 0
      %777 = vmatpush2.bf16.msra.mxu0 0
      %778 = vmatprep.subr.bf16.mxu0 0
      %779 = vmatpush2.bf16.msra.mxu0 0
      %780 = vmatprep.subr.bf16.mxu0 0
      %781 = vmatpush2.bf16.msra.mxu0 0
      %782 = vmatprep.mubr.bf16.mxu0 0
      %783 = vmatmul.mubr.bf16.gmra.mxu0 %v579
      %v784 = vpop.f32.mrf.mxu0
      %v785 = vadd.f32 %v697, %v784
      %v786 = vpop.f32.mrf.mxu0
      %v787 = vpop.f32.mrf.mxu0
      %v788 = vpop.f32.mrf.mxu0
      %789 = vdwg.mxu0
      %v790 = vpack.c.bf16 %v578, %v578
      %s791 = scalar_lea.vmem %s3, 128
      %v792 = vld [vmem:[%s791] sm:$0xf]
      %v793 = vld [vmem:[%s791 + $0x4] sm:$0xf]
      %v794 = vld [vmem:[%s791 + $0x8] sm:$0xf]
      %v795 = vld [vmem:[%s791 + $0xc] sm:$0xf]
      %v796 = vld [vmem:[%s791 + $0x10] sm:$0xf]
      %v797 = vld [vmem:[%s791 + $0x14] sm:$0xf]
      %v798 = vld [vmem:[%s791 + $0x18] sm:$0xf]
      %v799 = vld [vmem:[%s791 + $0x1c] sm:$0xf]
      %v800 = vld [vmem:[%s791 + $0x20] sm:$0xf]
      %v801 = vld [vmem:[%s791 + $0x24] sm:$0xf]
      %v802 = vld [vmem:[%s791 + $0x28] sm:$0xf]
      %v803 = vld [vmem:[%s791 + $0x2c] sm:$0xf]
      %v804 = vld [vmem:[%s791 + $0x30] sm:$0xf]
      %v805 = vld [vmem:[%s791 + $0x34] sm:$0xf]
      %v806 = vld [vmem:[%s791 + $0x38] sm:$0xf]
      %v807 = vld [vmem:[%s791 + $0x3c] sm:$0xf]
      %v824 = vunpack.c.l.b16 %v792
      %v825 = vunpack.c.l.b16 %v793
      %v826 = vunpack.c.l.b16 %v794
      %v827 = vunpack.c.l.b16 %v795
      %v828 = vunpack.c.l.b16 %v796
      %v829 = vunpack.c.l.b16 %v797
      %v830 = vunpack.c.l.b16 %v798
      %v831 = vunpack.c.l.b16 %v799
      %v832 = vunpack.c.l.b16 %v800
      %v833 = vunpack.c.l.b16 %v801
      %v834 = vunpack.c.l.b16 %v802
      %v835 = vunpack.c.l.b16 %v803
      %v836 = vunpack.c.l.b16 %v804
      %v837 = vunpack.c.l.b16 %v805
      %v838 = vunpack.c.l.b16 %v806
      %v839 = vunpack.c.l.b16 %v807
      %v840 = vpack.c.b16 %v825, %v824
      %v841 = vpack.c.b16 %v827, %v826
      %v842 = vpack.c.b16 %v829, %v828
      %v843 = vpack.c.b16 %v831, %v830
      %v844 = vpack.c.b16 %v833, %v832
      %v845 = vpack.c.b16 %v835, %v834
      %v846 = vpack.c.b16 %v837, %v836
      %v847 = vpack.c.b16 %v839, %v838
      %856 = vmatprep.subr.bf16.mxu0 0
      %857 = vmatpush1.bf16.msra.mxu0 %v847
      %858 = vmatprep.subr.bf16.mxu0 0
      %859 = vmatpush1.bf16.msra.mxu0 %v846
      %860 = vmatprep.subr.bf16.mxu0 0
      %861 = vmatpush1.bf16.msra.mxu0 %v845
      %862 = vmatprep.subr.bf16.mxu0 0
      %863 = vmatpush1.bf16.msra.mxu0 %v844
      %864 = vmatprep.subr.bf16.mxu0 0
      %865 = vmatpush1.bf16.msra.mxu0 %v843
      %866 = vmatprep.subr.bf16.mxu0 0
      %867 = vmatpush1.bf16.msra.mxu0 %v842
      %868 = vmatprep.subr.bf16.mxu0 0
      %869 = vmatpush1.bf16.msra.mxu0 %v841
      %870 = vmatprep.subr.bf16.mxu0 0
      %871 = vmatpush1.bf16.msra.mxu0 %v840
      %872 = vmatprep.subr.bf16.mxu0 0
      %873 = vmatpush2.bf16.msra.mxu0 0
      %874 = vmatprep.subr.bf16.mxu0 0
      %875 = vmatpush2.bf16.msra.mxu0 0
      %876 = vmatprep.subr.bf16.mxu0 0
      %877 = vmatpush2.bf16.msra.mxu0 0
      %878 = vmatprep.subr.bf16.mxu0 0
      %879 = vmatpush2.bf16.msra.mxu0 0
      %880 = vmatprep.subr.bf16.mxu0 0
      %881 = vmatpush2.bf16.msra.mxu0 0
      %882 = vmatprep.subr.bf16.mxu0 0
      %883 = vmatpush2.bf16.msra.mxu0 0
      %884 = vmatprep.subr.bf16.mxu0 0
      %885 = vmatpush2.bf16.msra.mxu0 0
      %886 = vmatprep.subr.bf16.mxu0 0
      %887 = vmatpush2.bf16.msra.mxu0 0
      %888 = vmatprep.mubr.bf16.mxu0 0
      %889 = vmatmul.mubr.bf16.gmra.mxu0 %v790
      %v890 = vpop.f32.mrf.mxu0
      %v891 = vadd.f32 0.0, %v890
      %v892 = vpop.f32.mrf.mxu0
      %v893 = vpop.f32.mrf.mxu0
      %v894 = vpop.f32.mrf.mxu0
      %895 = vdwg.mxu0
      %v896 = vadd.f32 %v785, %v891
      %v897 = vld [vmem:[%s4] sm:$0x1]
      %v899 = vlaneseq
      %v900 = vshrl.u32 %v899, 7
      %v901 = vsub.s32 0, %v900
      %v902 = vrot.slane %v897, %v901
      %v904 = vadd.f32 %v896, %v902
      %v905 = vadd.f32 %v904, %v221
      %vm906 = vcmp.gt.f32.partialorder %v905, 0.0
      %v907 = vmul.f32 %v905, 0.01
      %v908 = vsel %vm906, %v905, %v907
      %909 = vst [vmem:[%s219] sm:$0xff] %v908
      %p910 = scmp.lt.s32.totalorder %s16, 1
      %s911 = scalar_select %p910, %s16, 1
      %s912 = smul.addr %s911, 8
      %s913 = scalar_lea.vmem %s5, %s912
      // Predicated region
      $region41: #{resnet_block_forward.1} parent=39 // pred_check
        %p914 = pneg %p144
      $region42: #{resnet_block_forward.1} parent=39 // pred_check_branch
        %916 = sbr.rel (%p914) target = $region44
      $region43: #{resnet_block_forward.1} parent=39 // pred_region
        _
      $region44: #{resnet_block_forward.1} parent=39 // pred_fallthru
        _
    $region40: #{resnet_block_forward.1} parent=5 // pred_fallthru
      _
    %p917 = scmp.le.s32.totalorder 2, %s11
    // Predicated region
    $region45: #{resnet_block_forward.1} parent=5 // pred_check
      %p918 = pneg %p917
    $region46: #{resnet_block_forward.1} parent=5 // pred_check_branch
      %920 = sbr.rel (%p918) target = $region48
    $region47: #{resnet_block_forward.1} parent=5 // pred_region
      %s921 = ssub.s32 %s11, 2
      // Predicated region
      $region49: #{resnet_block_forward.1} parent=47 // pred_check
        %p922 = pneg %p150
      $region50: #{resnet_block_forward.1} parent=47 // pred_check_branch
        %924 = sbr.rel (%p922) target = $region52
      $region51: #{resnet_block_forward.1} parent=47 // pred_region
        %p925 = scmp.lt.s32.totalorder %s17, 1
        %s926 = scalar_select %p925, %s17, 1
        %s927 = smul.addr %s926, 8
        %s928 = scalar_lea.vmem %s5, %s927
      $region52: #{resnet_block_forward.1} parent=47 // pred_fallthru
        _
    $region48: #{resnet_block_forward.1} parent=5 // pred_fallthru
      _
  $region6: #{resnet_block_forward.1} parent=0 // loop_footer
    %s15 = sadd.s32 1, %s11
  $region7: #{resnet_block_forward.1} parent=0 // loop_footer_branch
    %10 = sbr.rel target = $region3
  $region8: #{resnet_block_forward.1} parent=0 // loop_exit
    _

</llo_original>
